<compile_context>
chip_gen: v5e
topology: v5e:2x2
jax: 0.10.0
libtpu: 0.0.40
codegen_flags: <defaults>
</compile_context>

<pallas_src>
import functools

import jax
import jax.numpy as jnp
from jax.experimental import pallas as pl
from jax.experimental.pallas import tpu as pltpu

LANE = 128            # vreg lane width: feature axes padded to multiples of this
SUBLANE_BF16 = 16     # bf16 sublane packing: node axis padded to multiples of this
COMPUTE_DTYPE = jnp.bfloat16   # MXU-native input dtype; accumulation stays f32

FUSED_MAX_NODES = 1024   # up to this many nodes: whole graph VMEM-resident, 1 call
TILE_M = 256             # node-row tile ("parallel" grid axis)
TILE_K = 256             # adjacency-column reduction tile (last, "arbitrary" axis)


def _round_up(n, m):
    return ((n + m - 1) // m) * m


def _derive_vmem_limit_bytes():
    """Per-generation VMEM budget: ~75% of physical, leaving pipeline headroom."""
    cap = 64 * 1024 * 1024   # conservative default = v7x physical VMEM per TC
    try:
        info = pltpu.get_tpu_info()
        v = getattr(info, "vmem_capacity_bytes", None)
        if v:
            cap = int(v)
    except Exception:
        pass
    return max(32 * 1024 * 1024, min((cap * 3) // 4, 112 * 1024 * 1024))


_VMEM_LIMIT_BYTES = _derive_vmem_limit_bytes()


# ----------------------------- Pallas kernels ------------------------------ #
def _fused_graph_sage_kernel(adj_ref, x_ref, w1_ref, b1_ref, w2_ref, b2_ref,
                             out_ref):
    """conv1 + ReLU + conv2 on a fully VMEM-resident (padded) graph.

    adj : [Np, Np]   bf16 row-normalized adjacency (mean aggregation)
    x   : [Np, Fp]   bf16 node features
    w1  : [Fp, 2*Hp] bf16 = [W1_l | W1_r]  (output-axis concat, 256-wide RHS)
    b1  : [1, Hp]    bf16
    w2  : [Hp, 2*Hp] bf16 = [W2_l | W2_r]
    b2  : [1, Hp]    bf16
    out : [Np, Hp]   f32  (lane-dense, padded lanes are exactly zero)
    """
    adj = adj_ref[...]
    x = x_ref[...]
    hp = out_ref.shape[-1]

    # Layer 1: project once with a 256-lane-wide RHS, then aggregate the
    # neighbor half:  h = relu(A @ (x @ W1_l) + x @ W1_r + b1).
    q1 = jnp.dot(x, w1_ref[...], preferred_element_type=jnp.float32)   # [Np, 2Hp]
    agg1 = jnp.dot(adj, q1[:, :hp].astype(adj.dtype),
                   preferred_element_type=jnp.float32)
    h = jnp.maximum(agg1 + q1[:, hp:] + b1_ref[...], 0.0).astype(adj.dtype)

    # Layer 2 (no activation).
    q2 = jnp.dot(h, w2_ref[...], preferred_element_type=jnp.float32)   # [Np, 2Hp]
    agg2 = jnp.dot(adj, q2[:, :hp].astype(adj.dtype),
                   preferred_element_type=jnp.float32)
    out_ref[...] = (agg2 + q2[:, hp:] + b2_ref[...]).astype(out_ref.dtype)


def _sage_layer_kernel(adj_ref, xs_ref, xr_ref, wl_ref, wr_ref, b_ref, o_ref,
                       acc_ref, *, apply_relu):
    """One SAGEConv layer; grid = (row tiles [parallel], A-col tiles [arbitrary])."""
    c = pl.program_id(1)

    @pl.when(c == 0)
    def _init():
        acc_ref[...] = jnp.zeros_like(acc_ref)

    # Mean aggregation: accumulate A[row_tile, col_tile] @ x[col_tile] in f32.
    acc_ref[...] += jnp.dot(adj_ref[...], xs_ref[...],
                            preferred_element_type=jnp.float32)

    @pl.when(c == pl.num_programs(1) - 1)
    def _finalize():
        # Two accumulated dots (no K-axis concat); MRB accumulates in place on v7x.
        out = (jnp.dot(acc_ref[...].astype(wl_ref.dtype), wl_ref[...],
                       preferred_element_type=jnp.float32)
               + jnp.dot(xr_ref[...], wr_ref[...],
                         preferred_element_type=jnp.float32)
               + b_ref[...])
        if apply_relu:
            out = jnp.maximum(out, 0.0)
        o_ref[...] = out.astype(o_ref.dtype)


# ------------------------------- Wrappers ----------------------------------- #
def _fused_graph_sage(adj, x, w1_l, w1_r, b1, w2_l, w2_r, b2):
    np_ = adj.shape[0]
    hp = w1_l.shape[1]
    # Output-axis weight concat -> one 256-lane-wide projection matmul per layer.
    w1 = jnp.concatenate([w1_l, w1_r], axis=1)   # [Fp, 2*Hp]
    w2 = jnp.concatenate([w2_l, w2_r], axis=1)   # [Hp, 2*Hp]
    vmem = pl.BlockSpec(memory_space=pltpu.MemorySpace.VMEM)
    return pl.pallas_call(
        _fused_graph_sage_kernel,
        out_shape=jax.ShapeDtypeStruct((np_, hp), jnp.float32),
        in_specs=[vmem] * 6,
        out_specs=vmem,
        compiler_params=pltpu.CompilerParams(vmem_limit_bytes=_VMEM_LIMIT_BYTES),
    )(adj, x, w1, b1, w2, b2)


def _sage_layer_tiled(adj, x, w_l, w_r, b, *, apply_relu, out_dtype):
    np_ = adj.shape[0]
    fin_p = x.shape[1]
    hp = w_l.shape[1]
    tm, tk = TILE_M, TILE_K
    grid = (np_ // tm, np_ // tk)   # rows "parallel", A-column reduction LAST
    kernel = functools.partial(_sage_layer_kernel, apply_relu=apply_relu)
    return pl.pallas_call(
        kernel,
        out_shape=jax.ShapeDtypeStruct((np_, hp), out_dtype),
        grid_spec=pltpu.PrefetchScalarGridSpec(
            num_scalar_prefetch=0,
            grid=grid,
            in_specs=[
                pl.BlockSpec((tm, tk), lambda r, c: (r, c)),      # A tile (streamed)
                pl.BlockSpec((tk, fin_p), lambda r, c: (c, 0)),   # neighbor features
                pl.BlockSpec((tm, fin_p), lambda r, c: (r, 0)),   # row-tile self feats
                pl.BlockSpec((fin_p, hp), lambda r, c: (0, 0)),   # W_l (resident)
                pl.BlockSpec((fin_p, hp), lambda r, c: (0, 0)),   # W_r (resident)
                pl.BlockSpec((1, hp), lambda r, c: (0, 0)),       # bias (resident)
            ],
            out_specs=pl.BlockSpec((tm, hp), lambda r, c: (r, 0)),
            scratch_shapes=[pltpu.VMEM((tm, fin_p), jnp.float32)],
        ),
        compiler_params=pltpu.CompilerParams(
            dimension_semantics=("parallel", "arbitrary"),
            vmem_limit_bytes=_VMEM_LIMIT_BYTES),
    )(adj, x, x, w_l, w_r, b)


def _padded_num_nodes(n):
    if n <= FUSED_MAX_NODES:
        return _round_up(max(n, SUBLANE_BF16), SUBLANE_BF16)
    return _round_up(n, max(TILE_M, TILE_K))


@jax.jit
def graph_sage_forward(x, edge_index, params):
    n, in_dim = x.shape
    hidden = params["w2_l"].shape[1]
    np_ = _padded_num_nodes(n)
    fp = _round_up(max(in_dim, LANE), LANE)
    hp = _round_up(max(hidden, LANE), LANE)

    # Row-normalized mean adjacency built DIRECTLY at the padded size (no extra
    # jnp.pad pass over the N^2 array); padded rows/cols stay exactly zero so
    # padded "nodes" never influence real outputs.
    src, dst = edge_index[0], edge_index[1]
    adj = jnp.zeros((np_, np_), jnp.float32).at[dst, src].add(1.0)
    deg = jnp.clip(jnp.sum(adj, axis=1, keepdims=True), 1.0, None)
    adj = (adj / deg).astype(COMPUTE_DTYPE)

    def pad2(a, rows, cols):
        out = jnp.zeros((rows, cols), COMPUTE_DTYPE)
        return out.at[:a.shape[0], :a.shape[1]].set(a.astype(COMPUTE_DTYPE))

    x_p = pad2(x, np_, fp)
    w1_l = pad2(params["w1_l"], fp, hp)
    w1_r = pad2(params["w1_r"], fp, hp)
    w2_l = pad2(params["w2_l"], hp, hp)
    w2_r = pad2(params["w2_r"], hp, hp)
    b1 = pad2(params["b1"], 1, hp)
    b2 = pad2(params["b2"], 1, hp)

    if n <= FUSED_MAX_NODES:
        # Single fused pallas_call: conv1 -> ReLU -> conv2, h never leaves VMEM.
        out_p = _fused_graph_sage(adj, x_p, w1_l, w1_r, b1, w2_l, w2_r, b2)
    else:
        # Row-tiled per-layer grid (h round-trips HBM as a tiny [Np, Hp] bf16).
        h = _sage_layer_tiled(adj, x_p, w1_l, w1_r, b1,
                              apply_relu=True, out_dtype=COMPUTE_DTYPE)
        out_p = _sage_layer_tiled(adj, h, w2_l, w2_r, b2,
                                  apply_relu=False, out_dtype=jnp.float32)
    return out_p[:n, :hidden]


# --------------------------- Reference & helpers ---------------------------- #
def graph_sage_reference(x, edge_index, params):
    """Pure-JAX f32 reference (PyG SAGEConv mean / root_weight defaults)."""
    n = x.shape[0]
    src, dst = edge_index[0], edge_index[1]
    adj = jnp.zeros((n, n), jnp.float32).at[dst, src].add(1.0)
    deg = jnp.clip(jnp.sum(adj, axis=1, keepdims=True), 1.0, None)
    adj = adj / deg
    h = jnp.maximum(adj @ x @ params["w1_l"] + x @ params["w1_r"] + params["b1"], 0.0)
    return adj @ h @ params["w2_l"] + h @ params["w2_r"] + params["b2"]


def init_params(key, in_dim, hidden=32):
    """Deterministic init (shapes match SAGEConv((-1,-1), 32) x2)."""
    k = jax.random.split(key, 6)

    def lin(key, fan_in, fan_out):
        scale = 1.0 / jnp.sqrt(jnp.float32(fan_in))
        return jax.random.uniform(key, (fan_in, fan_out), jnp.float32,
                                  minval=-scale, maxval=scale)

    def bias(key, fan_in, fan_out):
        scale = 1.0 / jnp.sqrt(jnp.float32(fan_in))
        return jax.random.uniform(key, (1, fan_out), jnp.float32,
                                  minval=-scale, maxval=scale)

    return {
        "w1_l": lin(k[0], in_dim, hidden), "w1_r": lin(k[1], in_dim, hidden),
        "b1": bias(k[2], in_dim, hidden),
        "w2_l": lin(k[3], hidden, hidden), "w2_r": lin(k[4], hidden, hidden),
        "b2": bias(k[5], hidden, hidden),
    }


def make_graph(key, num_nodes, in_dim, num_rand_edges):
    k_x, k_src, k_dst = jax.random.split(key, 3)
    x = jax.random.normal(k_x, (num_nodes, in_dim), jnp.float32)
    rand_src = jax.random.randint(k_src, (num_rand_edges,), 0, num_nodes)
    rand_dst = jax.random.randint(k_dst, (num_rand_edges,), 0, num_nodes)
    ring_src = jnp.arange(num_nodes)                    # ring so every node has
    ring_dst = (jnp.arange(num_nodes) + 1) % num_nodes  # >=1 incoming edge
    edge_index = jnp.stack([jnp.concatenate([rand_src, ring_src]),
                            jnp.concatenate([rand_dst, ring_dst])], axis=0)
    return x, edge_index


# ---------------------------------- Main ------------------------------------ #
if __name__ == "__main__":
    key = jax.random.PRNGKey(0)
    k_small, k_large, k_p1, k_p2 = jax.random.split(key, 4)
    hidden = 32

    # Case 1: toy graph -> single fused pallas_call (whole graph VMEM-resident).
    n_small, in_dim_small = 16, 8
    x_s, ei_s = make_graph(k_small, n_small, in_dim_small, num_rand_edges=48)
    params_s = init_params(k_p1, in_dim_small, hidden)
    out_s = jax.block_until_ready(graph_sage_forward(x_s, ei_s, params_s))
    ref_s = graph_sage_reference(x_s, ei_s, params_s)
    assert out_s.shape == (n_small, hidden)
    assert jnp.all(jnp.isfinite(out_s))
    assert float(jnp.max(jnp.abs(out_s - ref_s))) < 0.25   # bf16-in / f32-acc tol

    # Case 2: larger graph -> row-tiled per-layer grid ("parallel" 256-row tiles,
    # adjacency-column reduction as the last "arbitrary" axis).
    n_large, in_dim_large = 1100, 8
    x_l, ei_l = make_graph(k_large, n_large, in_dim_large,
                           num_rand_edges=4 * n_large)
    params_l = init_params(k_p2, in_dim_large, hidden)
    out_l = jax.block_until_ready(graph_sage_forward(x_l, ei_l, params_l))
    ref_l = graph_sage_reference(x_l, ei_l, params_l)
    assert out_l.shape == (n_large, hidden)
    assert jnp.all(jnp.isfinite(out_l))
    assert float(jnp.max(jnp.abs(out_l - ref_l))) < 0.25

    print("KERNEL_OK")
</pallas_src>

<mosaic_0001>
module attributes {stable_mosaic.version = 11 : i64} {
  func.func @_fused_graph_sage_kernel(%arg0: memref<16x16xbf16, #tpu.memory_space<vmem>>, %arg1: memref<16x128xbf16, #tpu.memory_space<vmem>>, %arg2: memref<128x256xbf16, #tpu.memory_space<vmem>>, %arg3: memref<1x128xbf16, #tpu.memory_space<vmem>>, %arg4: memref<128x256xbf16, #tpu.memory_space<vmem>>, %arg5: memref<1x128xbf16, #tpu.memory_space<vmem>>, %arg6: memref<16x128xf32, #tpu.memory_space<vmem>>) attributes {dimension_semantics = [], scalar_prefetch = 0 : i64, scratch_operands = 0 : i64, tpu.core_type = #tpu.core_type<tc>} {
    %c0 = arith.constant 0 : index
    %c0_0 = arith.constant 0 : index
    %0 = vector.load %arg0[%c0, %c0_0] : memref<16x16xbf16, #tpu.memory_space<vmem>>, vector<16x16xbf16>
    %c0_1 = arith.constant 0 : index
    %c0_2 = arith.constant 0 : index
    %1 = vector.load %arg1[%c0_1, %c0_2] : memref<16x128xbf16, #tpu.memory_space<vmem>>, vector<16x128xbf16>
    %c0_3 = arith.constant 0 : index
    %c0_4 = arith.constant 0 : index
    %2 = vector.load %arg2[%c0_3, %c0_4] : memref<128x256xbf16, #tpu.memory_space<vmem>>, vector<128x256xbf16>
    %cst = arith.constant dense<0.000000e+00> : vector<16x256xf32>
    %3 = tpu.matmul %1, %2, %cst {dimension_numbers = #tpu.dot_dimension_numbers<[1], [0], [0], [1], [0, 0, 1, 1], [], []>} : vector<16x128xbf16>, vector<128x256xbf16>, vector<16x256xf32> -> vector<16x256xf32>
    %4 = vector.extract_strided_slice %3 {offsets = [0, 0], sizes = [16, 128], strides = [1, 1]} : vector<16x256xf32> to vector<16x128xf32>
    %5 = arith.truncf %4 : vector<16x128xf32> to vector<16x128xbf16>
    %cst_5 = arith.constant dense<0.000000e+00> : vector<16x128xf32>
    %6 = tpu.matmul %0, %5, %cst_5 {dimension_numbers = #tpu.dot_dimension_numbers<[1], [0], [0], [1], [0, 0, 1, 1], [], []>} : vector<16x16xbf16>, vector<16x128xbf16>, vector<16x128xf32> -> vector<16x128xf32>
    %7 = vector.extract_strided_slice %3 {offsets = [0, 128], sizes = [16, 128], strides = [1, 1]} : vector<16x256xf32> to vector<16x128xf32>
    %8 = arith.addf %6, %7 : vector<16x128xf32>
    %c0_6 = arith.constant 0 : index
    %c0_7 = arith.constant 0 : index
    %9 = vector.load %arg3[%c0_6, %c0_7] : memref<1x128xbf16, #tpu.memory_space<vmem>>, vector<1x128xbf16>
    %10 = arith.extf %9 : vector<1x128xbf16> to vector<1x128xf32>
    %11 = vector.broadcast %10 : vector<1x128xf32> to vector<16x128xf32>
    %12 = arith.addf %8, %11 : vector<16x128xf32>
    %cst_8 = arith.constant 0.000000e+00 : f32
    %13 = vector.broadcast %cst_8 : f32 to vector<16x128xf32>
    %14 = arith.maximumf %12, %13 : vector<16x128xf32>
    %15 = arith.truncf %14 : vector<16x128xf32> to vector<16x128xbf16>
    %c0_9 = arith.constant 0 : index
    %c0_10 = arith.constant 0 : index
    %16 = vector.load %arg4[%c0_9, %c0_10] : memref<128x256xbf16, #tpu.memory_space<vmem>>, vector<128x256xbf16>
    %cst_11 = arith.constant dense<0.000000e+00> : vector<16x256xf32>
    %17 = tpu.matmul %15, %16, %cst_11 {dimension_numbers = #tpu.dot_dimension_numbers<[1], [0], [0], [1], [0, 0, 1, 1], [], []>} : vector<16x128xbf16>, vector<128x256xbf16>, vector<16x256xf32> -> vector<16x256xf32>
    %18 = vector.extract_strided_slice %17 {offsets = [0, 0], sizes = [16, 128], strides = [1, 1]} : vector<16x256xf32> to vector<16x128xf32>
    %19 = arith.truncf %18 : vector<16x128xf32> to vector<16x128xbf16>
    %cst_12 = arith.constant dense<0.000000e+00> : vector<16x128xf32>
    %20 = tpu.matmul %0, %19, %cst_12 {dimension_numbers = #tpu.dot_dimension_numbers<[1], [0], [0], [1], [0, 0, 1, 1], [], []>} : vector<16x16xbf16>, vector<16x128xbf16>, vector<16x128xf32> -> vector<16x128xf32>
    %21 = vector.extract_strided_slice %17 {offsets = [0, 128], sizes = [16, 128], strides = [1, 1]} : vector<16x256xf32> to vector<16x128xf32>
    %22 = arith.addf %20, %21 : vector<16x128xf32>
    %c0_13 = arith.constant 0 : index
    %c0_14 = arith.constant 0 : index
    %23 = vector.load %arg5[%c0_13, %c0_14] : memref<1x128xbf16, #tpu.memory_space<vmem>>, vector<1x128xbf16>
    %24 = arith.extf %23 : vector<1x128xbf16> to vector<1x128xf32>
    %25 = vector.broadcast %24 : vector<1x128xf32> to vector<16x128xf32>
    %26 = arith.addf %22, %25 : vector<16x128xf32>
    %c0_15 = arith.constant 0 : index
    %c0_16 = arith.constant 0 : index
    %27 = vector.load %arg6[%c0_15, %c0_16] : memref<16x128xf32, #tpu.memory_space<vmem>>, vector<16x128xf32>
    tpu.vector_store %arg6[%c0_15, %c0_16], %26 {strides = array<i32>} : memref<16x128xf32, #tpu.memory_space<vmem>>, vector<16x128xf32>,
    return
  }
}

</mosaic_0001>

<llo_original>
// kernel: graph_sage_forward.1
$region0: #{graph_sage_forward.1}
  #allocation0 [shape = 'u32[]', space=smem, size = 0x4, offset = 0x4, fixed_abs, tag = 'smem constant byte address 0x4 - core index']
  #allocation1 [shape = 'u32[72,128]{1,0:T(1,128)}', space=vmem, size = 0x9000, scoped, tag = 'internal scratch']
  %s0 = inlined_call_operand.vmem [shape: bf16[16,16], index: 0, kind: input, shape index: {}]
  %s1 = inlined_call_operand.vmem [shape: bf16[16,128], index: 1, kind: input, shape index: {}]
  %s2 = inlined_call_operand.vmem [shape: bf16[128,256], index: 2, kind: input, shape index: {}]
  %s3 = inlined_call_operand.vmem [shape: bf16[1,128], index: 3, kind: input, shape index: {}]
  %s4 = inlined_call_operand.vmem [shape: bf16[128,256], index: 4, kind: input, shape index: {}]
  %s5 = inlined_call_operand.vmem [shape: bf16[1,128], index: 5, kind: input, shape index: {}]
  %s6 = inlined_call_operand.hbm [shape: f32[16,128], index: 6, kind: output, shape index: {}]
  %s7 = sld [smem:[#allocation0]]
  $region34: #{graph_sage_forward.1} parent=0
    _
  %s9 = ssub.s32 1, %s7
  %s10 = scalar_select 0, %s9, %s7
  $region1: #{graph_sage_forward.1} parent=0
    #allocation2 [shape = 'u8[8192]{0}', space=vmem, size = 0x2000, scoped, tag = 'output window, operand 0, single buffered']
    #allocation3 [shape = 's32[1]{0}', space=sflag, size = 0x4, scoped, tag = 'scoped memory for graph_sage_forward.1']
    %11 = vsyncpa [#allocation3], 0
    // Predicated region
    $region2: #{graph_sage_forward.1} parent=1 // pred_check
      _
    $region3: #{graph_sage_forward.1} parent=1 // pred_check_branch
      %13 = sbr.rel (0) target = $region5
    $region4: #{graph_sage_forward.1} parent=1 // pred_region
      _
    $region5: #{graph_sage_forward.1} parent=1 // pred_fallthru
      _
    // Predicated region
    $region6: #{graph_sage_forward.1} parent=1 // pred_check
      _
    $region7: #{graph_sage_forward.1} parent=1 // pred_check_branch
      %15 = sbr.rel (0) target = $region9
    $region8: #{graph_sage_forward.1} parent=1 // pred_region
      _
    $region9: #{graph_sage_forward.1} parent=1 // pred_fallthru
      _
    // Predicated region
    $region10: #{graph_sage_forward.1} parent=1 // pred_check
      _
    $region11: #{graph_sage_forward.1} parent=1 // pred_check_branch
      %17 = sbr.rel (0) target = $region13
    $region12: #{graph_sage_forward.1} parent=1 // pred_region
      _
    $region13: #{graph_sage_forward.1} parent=1 // pred_fallthru
      _
    // Predicated region
    $region14: #{graph_sage_forward.1} parent=1 // pred_check
      _
    $region15: #{graph_sage_forward.1} parent=1 // pred_check_branch
      %19 = sbr.rel (0) target = $region17
    $region16: #{graph_sage_forward.1} parent=1 // pred_region
      _
    $region17: #{graph_sage_forward.1} parent=1 // pred_fallthru
      _
    // Predicated region
    $region18: #{graph_sage_forward.1} parent=1 // pred_check
      _
    $region19: #{graph_sage_forward.1} parent=1 // pred_check_branch
      %21 = sbr.rel (0) target = $region21
    $region20: #{graph_sage_forward.1} parent=1 // pred_region
      _
    $region21: #{graph_sage_forward.1} parent=1 // pred_fallthru
      _
    // Predicated region
    $region22: #{graph_sage_forward.1} parent=1 // pred_check
      _
    $region23: #{graph_sage_forward.1} parent=1 // pred_check_branch
      %23 = sbr.rel (0) target = $region25
    $region24: #{graph_sage_forward.1} parent=1 // pred_region
      _
    $region25: #{graph_sage_forward.1} parent=1 // pred_fallthru
      _
    %v25 = vld [vmem:[%s0] sm:$0xf]
    %v26 = vld [vmem:[%s0 + $0x4] sm:$0xf]
    %v27 = vld [vmem:[%s1] sm:$0xf]
    %v28 = vld [vmem:[%s1 + $0x4] sm:$0xf]
    %v29 = vld [vmem:[%s2] sm:$0xff]
    %v30 = vld [vmem:[%s2 + $0x8] sm:$0xff]
    %v31 = vld [vmem:[%s2 + $0x10] sm:$0xff]
    %v32 = vld [vmem:[%s2 + $0x18] sm:$0xff]
    %v33 = vld [vmem:[%s2 + $0x20] sm:$0xff]
    %v34 = vld [vmem:[%s2 + $0x28] sm:$0xff]
    %v35 = vld [vmem:[%s2 + $0x30] sm:$0xff]
    %v36 = vld [vmem:[%s2 + $0x38] sm:$0xff]
    %v37 = vld [vmem:[%s2 + $0x40] sm:$0xff]
    %v38 = vld [vmem:[%s2 + $0x48] sm:$0xff]
    %v39 = vld [vmem:[%s2 + $0x50] sm:$0xff]
    %v40 = vld [vmem:[%s2 + $0x58] sm:$0xff]
    %v41 = vld [vmem:[%s2 + $0x60] sm:$0xff]
    %v42 = vld [vmem:[%s2 + $0x68] sm:$0xff]
    %v43 = vld [vmem:[%s2 + $0x70] sm:$0xff]
    %v44 = vld [vmem:[%s2 + $0x78] sm:$0xff]
    %v47 = vunpack.c.l.b16 %v27
    %v48 = vunpack.c.l.b16 %v28
    %v49 = vpack.c.b16 %v48, %v47
    %v67 = vunpack.c.l.b16 %v29
    %v68 = vunpack.c.h.b16 %v29
    %v69 = vunpack.c.l.b16 %v30
    %v70 = vunpack.c.h.b16 %v30
    %v71 = vunpack.c.l.b16 %v31
    %v72 = vunpack.c.h.b16 %v31
    %v73 = vunpack.c.l.b16 %v32
    %v74 = vunpack.c.h.b16 %v32
    %v75 = vunpack.c.l.b16 %v33
    %v76 = vunpack.c.h.b16 %v33
    %v77 = vunpack.c.l.b16 %v34
    %v78 = vunpack.c.h.b16 %v34
    %v79 = vunpack.c.l.b16 %v35
    %v80 = vunpack.c.h.b16 %v35
    %v81 = vunpack.c.l.b16 %v36
    %v82 = vunpack.c.h.b16 %v36
    %v83 = vunpack.c.l.b16 %v37
    %v84 = vunpack.c.h.b16 %v37
    %v85 = vunpack.c.l.b16 %v38
    %v86 = vunpack.c.h.b16 %v38
    %v87 = vunpack.c.l.b16 %v39
    %v88 = vunpack.c.h.b16 %v39
    %v89 = vunpack.c.l.b16 %v40
    %v90 = vunpack.c.h.b16 %v40
    %v91 = vunpack.c.l.b16 %v41
    %v92 = vunpack.c.h.b16 %v41
    %v93 = vunpack.c.l.b16 %v42
    %v94 = vunpack.c.h.b16 %v42
    %v95 = vunpack.c.l.b16 %v43
    %v96 = vunpack.c.h.b16 %v43
    %v97 = vunpack.c.l.b16 %v44
    %v98 = vunpack.c.h.b16 %v44
    %v99 = vpack.c.b16 %v69, %v67
    %v100 = vpack.c.b16 %v70, %v68
    %v101 = vpack.c.b16 %v73, %v71
    %v102 = vpack.c.b16 %v74, %v72
    %v103 = vpack.c.b16 %v77, %v75
    %v104 = vpack.c.b16 %v78, %v76
    %v105 = vpack.c.b16 %v81, %v79
    %v106 = vpack.c.b16 %v82, %v80
    %v107 = vpack.c.b16 %v85, %v83
    %v108 = vpack.c.b16 %v86, %v84
    %v109 = vpack.c.b16 %v89, %v87
    %v110 = vpack.c.b16 %v90, %v88
    %v111 = vpack.c.b16 %v93, %v91
    %v112 = vpack.c.b16 %v94, %v92
    %v113 = vpack.c.b16 %v97, %v95
    %v114 = vpack.c.b16 %v98, %v96
    %131 = vmatpush.bf16.msra.mxu0 %v113
    %132 = vmatpush.bf16.msra.mxu0 %v111
    %133 = vmatpush.bf16.msra.mxu0 %v109
    %134 = vmatpush.bf16.msra.mxu0 %v107
    %135 = vmatpush.bf16.msra.mxu0 %v105
    %136 = vmatpush.bf16.msra.mxu0 %v103
    %137 = vmatpush.bf16.msra.mxu0 %v101
    %138 = vmatpush.bf16.msra.mxu0 %v99
    %139 = vmatmul.bf16.gmra.mxu0 %v49
    %v140 = vpop.f32.mrf.mxu0
    %v141 = vadd.f32 0.0, %v140
    %v142 = vpop.f32.mrf.mxu0
    %v143 = vadd.f32 0.0, %v142
    %144 = vdwg.mxu0
    %145 = vmatpush.bf16.msra.mxu0 %v114
    %146 = vmatpush.bf16.msra.mxu0 %v112
    %147 = vmatpush.bf16.msra.mxu0 %v110
    %148 = vmatpush.bf16.msra.mxu0 %v108
    %149 = vmatpush.bf16.msra.mxu0 %v106
    %150 = vmatpush.bf16.msra.mxu0 %v104
    %151 = vmatpush.bf16.msra.mxu0 %v102
    %152 = vmatpush.bf16.msra.mxu0 %v100
    %153 = vmatmul.bf16.gmra.mxu0 %v49
    %v154 = vpop.f32.mrf.mxu0
    %v155 = vadd.f32 0.0, %v154
    %v156 = vpop.f32.mrf.mxu0
    %v157 = vadd.f32 0.0, %v156
    %158 = vdwg.mxu0
    %v159 = vpack.c.bf16 %v143, %v141
    %v162 = vunpack.c.l.b16 %v25
    %v163 = vunpack.c.l.b16 %v26
    %v164 = vpack.c.b16 %v163, %v162
    %vm165 = vcmask 130048
    %v167 = vsel %vm165, %v164, 0
    %169 = vmatpush.bf16.msra.mxu0 0
    %170 = vmatpush.bf16.msra.mxu0 0
    %171 = vmatpush.bf16.msra.mxu0 0
    %172 = vmatpush.bf16.msra.mxu0 0
    %173 = vmatpush.bf16.msra.mxu0 0
    %174 = vmatpush.bf16.msra.mxu0 0
    %175 = vmatpush.bf16.msra.mxu0 0
    %176 = vmatpush.bf16.msra.mxu0 %v159
    %177 = vmatmul.bf16.gmra.mxu0 %v167
    %v178 = vpop.f32.mrf.mxu0
    %v179 = vadd.f32 %v155, %v178
    %v180 = vpop.f32.mrf.mxu0
    %v181 = vadd.f32 %v157, %v180
    %182 = vdwg.mxu0
    %v183 = vld [vmem:[%s3] sm:$0x1]
    %v184 = vunpack.c.l.bf16 %v183
    %v185 = vperm.slane %v184, 0
    %v186 = vadd.f32 %v179, %v185
    %v187 = vadd.f32 %v181, %v185
    %v188 = vmax.f32 %v186, 0.0
    %v189 = vmax.f32 %v187, 0.0
    %v190 = vpack.c.bf16 %v189, %v188
    %v191 = vld [vmem:[%s4] sm:$0xff]
    %v192 = vld [vmem:[%s4 + $0x8] sm:$0xff]
    %v193 = vld [vmem:[%s4 + $0x10] sm:$0xff]
    %v194 = vld [vmem:[%s4 + $0x18] sm:$0xff]
    %v195 = vld [vmem:[%s4 + $0x20] sm:$0xff]
    %v196 = vld [vmem:[%s4 + $0x28] sm:$0xff]
    %v197 = vld [vmem:[%s4 + $0x30] sm:$0xff]
    %v198 = vld [vmem:[%s4 + $0x38] sm:$0xff]
    %v199 = vld [vmem:[%s4 + $0x40] sm:$0xff]
    %v200 = vld [vmem:[%s4 + $0x48] sm:$0xff]
    %v201 = vld [vmem:[%s4 + $0x50] sm:$0xff]
    %v202 = vld [vmem:[%s4 + $0x58] sm:$0xff]
    %v203 = vld [vmem:[%s4 + $0x60] sm:$0xff]
    %v204 = vld [vmem:[%s4 + $0x68] sm:$0xff]
    %v205 = vld [vmem:[%s4 + $0x70] sm:$0xff]
    %v206 = vld [vmem:[%s4 + $0x78] sm:$0xff]
    %v223 = vunpack.c.l.b16 %v191
    %v224 = vunpack.c.h.b16 %v191
    %v225 = vunpack.c.l.b16 %v192
    %v226 = vunpack.c.h.b16 %v192
    %v227 = vunpack.c.l.b16 %v193
    %v228 = vunpack.c.h.b16 %v193
    %v229 = vunpack.c.l.b16 %v194
    %v230 = vunpack.c.h.b16 %v194
    %v231 = vunpack.c.l.b16 %v195
    %v232 = vunpack.c.h.b16 %v195
    %v233 = vunpack.c.l.b16 %v196
    %v234 = vunpack.c.h.b16 %v196
    %v235 = vunpack.c.l.b16 %v197
    %v236 = vunpack.c.h.b16 %v197
    %v237 = vunpack.c.l.b16 %v198
    %v238 = vunpack.c.h.b16 %v198
    %v239 = vunpack.c.l.b16 %v199
    %v240 = vunpack.c.h.b16 %v199
    %v241 = vunpack.c.l.b16 %v200
    %v242 = vunpack.c.h.b16 %v200
    %v243 = vunpack.c.l.b16 %v201
    %v244 = vunpack.c.h.b16 %v201
    %v245 = vunpack.c.l.b16 %v202
    %v246 = vunpack.c.h.b16 %v202
    %v247 = vunpack.c.l.b16 %v203
    %v248 = vunpack.c.h.b16 %v203
    %v249 = vunpack.c.l.b16 %v204
    %v250 = vunpack.c.h.b16 %v204
    %v251 = vunpack.c.l.b16 %v205
    %v252 = vunpack.c.h.b16 %v205
    %v253 = vunpack.c.l.b16 %v206
    %v254 = vunpack.c.h.b16 %v206
    %v255 = vpack.c.b16 %v225, %v223
    %v256 = vpack.c.b16 %v226, %v224
    %v257 = vpack.c.b16 %v229, %v227
    %v258 = vpack.c.b16 %v230, %v228
    %v259 = vpack.c.b16 %v233, %v231
    %v260 = vpack.c.b16 %v234, %v232
    %v261 = vpack.c.b16 %v237, %v235
    %v262 = vpack.c.b16 %v238, %v236
    %v263 = vpack.c.b16 %v241, %v239
    %v264 = vpack.c.b16 %v242, %v240
    %v265 = vpack.c.b16 %v245, %v243
    %v266 = vpack.c.b16 %v246, %v244
    %v267 = vpack.c.b16 %v249, %v247
    %v268 = vpack.c.b16 %v250, %v248
    %v269 = vpack.c.b16 %v253, %v251
    %v270 = vpack.c.b16 %v254, %v252
    %287 = vmatpush.bf16.msra.mxu0 %v269
    %288 = vmatpush.bf16.msra.mxu0 %v267
    %289 = vmatpush.bf16.msra.mxu0 %v265
    %290 = vmatpush.bf16.msra.mxu0 %v263
    %291 = vmatpush.bf16.msra.mxu0 %v261
    %292 = vmatpush.bf16.msra.mxu0 %v259
    %293 = vmatpush.bf16.msra.mxu0 %v257
    %294 = vmatpush.bf16.msra.mxu0 %v255
    %295 = vmatmul.bf16.gmra.mxu0 %v190
    %v296 = vpop.f32.mrf.mxu0
    %v297 = vadd.f32 0.0, %v296
    %v298 = vpop.f32.mrf.mxu0
    %v299 = vadd.f32 0.0, %v298
    %300 = vdwg.mxu0
    %301 = vmatpush.bf16.msra.mxu0 %v270
    %302 = vmatpush.bf16.msra.mxu0 %v268
    %303 = vmatpush.bf16.msra.mxu0 %v266
    %304 = vmatpush.bf16.msra.mxu0 %v264
    %305 = vmatpush.bf16.msra.mxu0 %v262
    %306 = vmatpush.bf16.msra.mxu0 %v260
    %307 = vmatpush.bf16.msra.mxu0 %v258
    %308 = vmatpush.bf16.msra.mxu0 %v256
    %309 = vmatmul.bf16.gmra.mxu0 %v190
    %v310 = vpop.f32.mrf.mxu0
    %v311 = vadd.f32 0.0, %v310
    %v312 = vpop.f32.mrf.mxu0
    %v313 = vadd.f32 0.0, %v312
    %314 = vdwg.mxu0
    %v315 = vpack.c.bf16 %v299, %v297
    %316 = vmatpush.bf16.msra.mxu0 0
    %317 = vmatpush.bf16.msra.mxu0 0
    %318 = vmatpush.bf16.msra.mxu0 0
    %319 = vmatpush.bf16.msra.mxu0 0
    %320 = vmatpush.bf16.msra.mxu0 0
    %321 = vmatpush.bf16.msra.mxu0 0
    %322 = vmatpush.bf16.msra.mxu0 0
    %323 = vmatpush.bf16.msra.mxu0 %v315
    %324 = vmatmul.bf16.gmra.mxu0 %v167
    %v325 = vpop.f32.mrf.mxu0
    %v326 = vadd.f32 %v311, %v325
    %v327 = vpop.f32.mrf.mxu0
    %v328 = vadd.f32 %v313, %v327
    %329 = vdwg.mxu0
    %v330 = vld [vmem:[%s5] sm:$0x1]
    %v331 = vunpack.c.l.bf16 %v330
    %v332 = vperm.slane %v331, 0
    %v333 = vadd.f32 %v326, %v332
    %v334 = vadd.f32 %v328, %v332
    %335 = vst [vmem:[#allocation2] sm:$0xff] %v333
    %336 = vst [vmem:[#allocation2 + $0x8] sm:$0xff] %v334
    // Predicated region
    $region26: #{graph_sage_forward.1} parent=1 // pred_check
      _
    $region27: #{graph_sage_forward.1} parent=1 // pred_check_branch
      %338 = sbr.rel (0) target = $region29
    $region28: #{graph_sage_forward.1} parent=1 // pred_region
      %340 = vsyncadd [#allocation3], 0
      %s341 = sshll.u32 [#allocation2], 4
      %s342 = int_to_ptr.vmem [resolvable:$true] %s341
      %s343 = sshll.u32 %s6, 4
      %s344 = int_to_ptr.hbm [resolvable:$true] %s343
      %349 = dma.vmem_to_hbm [thread:$0]  %s342, 256, %s344, [#allocation3], 128, 128, 8
    $region29: #{graph_sage_forward.1} parent=1 // pred_fallthru
      _
    // Predicated region
    $region30: #{graph_sage_forward.1} parent=1 // pred_check
      _
    $region31: #{graph_sage_forward.1} parent=1 // pred_check_branch
      %351 = sbr.rel (0) target = $region33
    $region32: #{graph_sage_forward.1} parent=1 // pred_region
      %353 = dma.done [#allocation3], 256
    $region33: #{graph_sage_forward.1} parent=1 // pred_fallthru
      _
    %354 = vsyncpa [#allocation3], 1

</llo_original>
